<compile_context>
chip_gen: v6e
topology: v6e:2x2x1
jax: 0.10.0
libtpu: 0.0.40
codegen_flags: <defaults>
</compile_context>

<pallas_src>
import jax
import jax.numpy as jnp
from jax.experimental import pallas as pl
from jax.experimental.pallas import tpu as pltpu

NUM_CLASSES = 9            # torch module hard-codes predictions = zeros((9, 2))
LANES = 128
NUM_CORE_SPLITS = 2        # v7x has 2 TensorCores; serial (cheap) on v5e/v6e
ACC_ROWS = 24              # 9 total-counts + 9 attr1-counts + 1 attr1 counter, padded to 8x


def _round_up(x, m):
    return ((x + m - 1) // m) * m


def spd_kernel(preds_ref, attrs_ref, acc_ref):
    """One (block_rows, 128) tile: accumulate lane-resident partial counts.

    acc_ref block shape (1, ACC_ROWS, 128) int32, resident across the inner
    (reduction) grid axis:
      rows [0, 9)              : per-class counts over ALL elements
      rows [9, 18)             : per-class counts over elements with attr == 1
      row  18                  : count of elements with attr == 1
    """
    @pl.when(pl.program_id(1) == 0)
    def _init():
        acc_ref[...] = jnp.zeros_like(acc_ref)

    # Widen once; all compares / sums stay on the well-supported 32-bit path.
    preds = preds_ref[...].astype(jnp.int32)          # (block_rows, 128)
    attr1 = attrs_ref[...].astype(jnp.int32) != 0     # bool (block_rows, 128)

    # attr==1 element count (padding has attr=0, contributes nothing)
    acc_ref[0, 2 * NUM_CLASSES:2 * NUM_CLASSES + 1, :] += jnp.sum(
        attr1.astype(jnp.int32), axis=0, keepdims=True)

    # 9 unrolled scalar class compares; padded preds are -1 and match nothing.
    for c in range(NUM_CLASSES):
        onehot = preds == c                            # bool (block_rows, 128)
        acc_ref[0, c:c + 1, :] += jnp.sum(
            onehot.astype(jnp.int32), axis=0, keepdims=True)
        acc_ref[0, NUM_CLASSES + c:NUM_CLASSES + c + 1, :] += jnp.sum(
            (onehot & attr1).astype(jnp.int32), axis=0, keepdims=True)


def spd_loss(preds, attrs, *, block_rows=1024):
    """preds: (N,) ints in [0, 9); attrs: (N,) ints in {0, 1}. Returns scalar SPD."""
    preds = preds.reshape(-1)
    attrs = attrs.reshape(-1)
    n = preds.shape[0]

    # int8 inputs: inputs are the only HBM traffic -> 4x fewer bytes.
    preds8 = preds.astype(jnp.int8)
    attrs8 = attrs.astype(jnp.int8)

    rows = _round_up(n, LANES) // LANES
    block_rows = _round_up(block_rows, 32)             # int8 native tile is (32,128)
    br = min(block_rows, _round_up(rows, 32))
    rows_padded = _round_up(rows, NUM_CORE_SPLITS * br)
    total_padded = rows_padded * LANES
    blocks_per_core = rows_padded // (NUM_CORE_SPLITS * br)

    pad = total_padded - n
    preds_p = jnp.pad(preds8, (0, pad), constant_values=-1).reshape(rows_padded, LANES)
    attrs_p = jnp.pad(attrs8, (0, pad), constant_values=0).reshape(rows_padded, LANES)

    acc_out = pl.pallas_call(
        spd_kernel,
        out_shape=jax.ShapeDtypeStruct((NUM_CORE_SPLITS, ACC_ROWS, LANES), jnp.int32),
        grid=(NUM_CORE_SPLITS, blocks_per_core),
        in_specs=[
            pl.BlockSpec((br, LANES), lambda p, i: (p * blocks_per_core + i, 0)),
            pl.BlockSpec((br, LANES), lambda p, i: (p * blocks_per_core + i, 0)),
        ],
        out_specs=pl.BlockSpec((1, ACC_ROWS, LANES), lambda p, i: (p, 0, 0)),
        compiler_params=pltpu.CompilerParams(
            dimension_semantics=("parallel", "arbitrary"),
            vmem_limit_bytes=32 * 1024 * 1024,
        ),
    )(preds_p, attrs_p)

    # Finalize in XLA on a tiny array: combine the two per-core slabs, do the
    # cross-lane reductions, and apply the SPD formula.
    acc = acc_out.sum(axis=0)                                      # (ACC_ROWS, 128) int32
    tot_c = acc[0:NUM_CLASSES].sum(axis=1).astype(jnp.float32)     # (9,)
    a1_c = acc[NUM_CLASSES:2 * NUM_CLASSES].sum(axis=1).astype(jnp.float32)
    n1 = acc[2 * NUM_CLASSES].sum().astype(jnp.float32)
    n0 = jnp.float32(n) - n1
    a0_c = tot_c - a1_c
    # NOTE: like the torch original, this is inf/nan if one attr group is empty.
    diff = a0_c / n0 - a1_c / n1
    return jnp.sum(diff * diff)


def spd_loss_ref(preds, attrs):
    """Pure-JAX reference mirroring the torch histogram semantics (preds in [0,9))."""
    preds = preds.reshape(-1)
    attrs = attrs.reshape(-1)
    n = preds.shape[0]
    onehot = preds[:, None] == jnp.arange(NUM_CLASSES)[None, :]    # (N, 9)
    a1 = (attrs != 0)[:, None]
    c1 = jnp.sum(onehot & a1, axis=0).astype(jnp.float32)
    c0 = jnp.sum(onehot & ~a1, axis=0).astype(jnp.float32)
    n1 = jnp.sum(attrs != 0).astype(jnp.float32)
    n0 = jnp.float32(n) - n1
    return jnp.sum((c0 / n0 - c1 / n1) ** 2)


if __name__ == "__main__":
    key = jax.random.PRNGKey(0)
    k1, k2 = jax.random.split(key)

    # small case matching the module (seq = 8 predictions)
    N = 8
    preds = jax.random.randint(k1, (N,), 0, NUM_CLASSES, dtype=jnp.int32)
    attrs = jax.random.randint(k2, (N,), 0, 2, dtype=jnp.int32)
    # ensure both attribute groups are non-empty (avoid div-by-zero, same as torch)
    attrs = attrs.at[0].set(0).at[1].set(1)

    out = jax.block_until_ready(spd_loss(preds, attrs))
    ref = spd_loss_ref(preds, attrs)
    assert jnp.allclose(out, ref, rtol=1e-5, atol=1e-6), (out, ref)

    # larger case with a small block size to exercise the tiled reduction
    # (multiple inner grid steps) and the 2-way core split + padding paths.
    N2 = 20000
    k3, k4 = jax.random.split(k1)
    preds2 = jax.random.randint(k3, (N2,), 0, NUM_CLASSES, dtype=jnp.int32)
    attrs2 = jax.random.randint(k4, (N2,), 0, 2, dtype=jnp.int32)
    out2 = jax.block_until_ready(spd_loss(preds2, attrs2, block_rows=32))
    ref2 = spd_loss_ref(preds2, attrs2)
    assert jnp.allclose(out2, ref2, rtol=1e-5, atol=1e-5), (out2, ref2)

    print("KERNEL_OK")
</pallas_src>

<mosaic_0001>
module attributes {stable_mosaic.version = 11 : i64} {
  func.func @spd_kernel(%arg0: i32, %arg1: i32, %arg2: memref<32x128xi8, #tpu.memory_space<vmem>>, %arg3: memref<32x128xi8, #tpu.memory_space<vmem>>, %arg4: memref<1x24x128xi32, #tpu.memory_space<vmem>>) attributes {dimension_semantics = [#tpu.dimension_semantics<parallel>, #tpu.dimension_semantics<arbitrary>], iteration_bounds = array<i64: 2, 1>, scalar_prefetch = 0 : i64, scratch_operands = 0 : i64, tpu.core_type = #tpu.core_type<tc>, window_params = [{transform_indices = @transform_0, window_bounds = array<i64: 32, 128>}, {transform_indices = @transform_1, window_bounds = array<i64: 32, 128>}, {transform_indices = @transform_2, window_bounds = array<i64: 1, 24, 128>}]} {
    %c0_i32 = arith.constant 0 : i32
    %0 = arith.cmpi eq, %arg1, %c0_i32 : i32
    %1 = arith.extui %0 : i1 to i32
    %c0_i32_0 = arith.constant 0 : i32
    %2 = arith.cmpi ne, %1, %c0_i32_0 : i32
    scf.if %2 {
      %c0_i32_120 = arith.constant 0 : i32
      %207 = vector.broadcast %c0_i32_120 : i32 to vector<1x24x128xi32>
      %c0_121 = arith.constant 0 : index
      %c0_122 = arith.constant 0 : index
      %c0_123 = arith.constant 0 : index
      %208 = vector.load %arg4[%c0_121, %c0_122, %c0_123] : memref<1x24x128xi32, #tpu.memory_space<vmem>>, vector<1x24x128xi32>
      tpu.vector_store %arg4[%c0_121, %c0_122, %c0_123], %207 {strides = array<i32>} : memref<1x24x128xi32, #tpu.memory_space<vmem>>, vector<1x24x128xi32>,
    } else {
    }
    %c0 = arith.constant 0 : index
    %c0_1 = arith.constant 0 : index
    %3 = vector.load %arg2[%c0, %c0_1] : memref<32x128xi8, #tpu.memory_space<vmem>>, vector<32x128xi8>
    %4 = arith.extsi %3 : vector<32x128xi8> to vector<32x128xi32>
    %c0_2 = arith.constant 0 : index
    %c0_3 = arith.constant 0 : index
    %5 = vector.load %arg3[%c0_2, %c0_3] : memref<32x128xi8, #tpu.memory_space<vmem>>, vector<32x128xi8>
    %6 = arith.extsi %5 : vector<32x128xi8> to vector<32x128xi32>
    %c0_i32_4 = arith.constant 0 : i32
    %7 = vector.broadcast %c0_i32_4 : i32 to vector<32x128xi32>
    %8 = arith.cmpi ne, %6, %7 : vector<32x128xi32>
    %c0_5 = arith.constant 0 : index
    %c18 = arith.constant 18 : index
    %c0_6 = arith.constant 0 : index
    %9 = vector.load %arg4[%c0_5, %c18, %c0_6] : memref<1x24x128xi32, #tpu.memory_space<vmem>>, vector<1x1x128xi32>
    %10 = vector.shape_cast %9 : vector<1x1x128xi32> to vector<1x128xi32>
    %11 = arith.extui %8 : vector<32x128xi1> to vector<32x128xi32>
    %cst = arith.constant dense<0> : vector<128xi32>
    %12 = vector.multi_reduction <add>, %11, %cst [0] : vector<32x128xi32> to vector<128xi32>
    %13 = vector.shape_cast %12 : vector<128xi32> to vector<1x128xi32>
    %14 = arith.addi %10, %13 : vector<1x128xi32>
    %c0_7 = arith.constant 0 : index
    %c18_8 = arith.constant 18 : index
    %c0_9 = arith.constant 0 : index
    %15 = vector.load %arg4[%c0_7, %c18_8, %c0_9] : memref<1x24x128xi32, #tpu.memory_space<vmem>>, vector<1x1x128xi32>
    %16 = vector.shape_cast %15 : vector<1x1x128xi32> to vector<1x128xi32>
    %17 = vector.shape_cast %14 : vector<1x128xi32> to vector<1x1x128xi32>
    tpu.vector_store %arg4[%c0_7, %c18_8, %c0_9], %17 {strides = array<i32>} : memref<1x24x128xi32, #tpu.memory_space<vmem>>, vector<1x1x128xi32>,
    %c0_i32_10 = arith.constant 0 : i32
    %18 = vector.broadcast %c0_i32_10 : i32 to vector<32x128xi32>
    %19 = arith.cmpi eq, %4, %18 : vector<32x128xi32>
    %c0_11 = arith.constant 0 : index
    %c0_12 = arith.constant 0 : index
    %c0_13 = arith.constant 0 : index
    %20 = vector.load %arg4[%c0_11, %c0_12, %c0_13] : memref<1x24x128xi32, #tpu.memory_space<vmem>>, vector<1x1x128xi32>
    %21 = vector.shape_cast %20 : vector<1x1x128xi32> to vector<1x128xi32>
    %22 = arith.extui %19 : vector<32x128xi1> to vector<32x128xi32>
    %cst_14 = arith.constant dense<0> : vector<128xi32>
    %23 = vector.multi_reduction <add>, %22, %cst_14 [0] : vector<32x128xi32> to vector<128xi32>
    %24 = vector.shape_cast %23 : vector<128xi32> to vector<1x128xi32>
    %25 = arith.addi %21, %24 : vector<1x128xi32>
    %c0_15 = arith.constant 0 : index
    %c0_16 = arith.constant 0 : index
    %c0_17 = arith.constant 0 : index
    %26 = vector.load %arg4[%c0_15, %c0_16, %c0_17] : memref<1x24x128xi32, #tpu.memory_space<vmem>>, vector<1x1x128xi32>
    %27 = vector.shape_cast %26 : vector<1x1x128xi32> to vector<1x128xi32>
    %28 = vector.shape_cast %25 : vector<1x128xi32> to vector<1x1x128xi32>
    tpu.vector_store %arg4[%c0_15, %c0_16, %c0_17], %28 {strides = array<i32>} : memref<1x24x128xi32, #tpu.memory_space<vmem>>, vector<1x1x128xi32>,
    %c0_18 = arith.constant 0 : index
    %c9 = arith.constant 9 : index
    %c0_19 = arith.constant 0 : index
    %29 = vector.load %arg4[%c0_18, %c9, %c0_19] : memref<1x24x128xi32, #tpu.memory_space<vmem>>, vector<1x1x128xi32>
    %30 = vector.shape_cast %29 : vector<1x1x128xi32> to vector<1x128xi32>
    %31 = arith.andi %19, %8 : vector<32x128xi1>
    %32 = arith.extui %31 : vector<32x128xi1> to vector<32x128xi32>
    %cst_20 = arith.constant dense<0> : vector<128xi32>
    %33 = vector.multi_reduction <add>, %32, %cst_20 [0] : vector<32x128xi32> to vector<128xi32>
    %34 = vector.shape_cast %33 : vector<128xi32> to vector<1x128xi32>
    %35 = arith.addi %30, %34 : vector<1x128xi32>
    %c0_21 = arith.constant 0 : index
    %c9_22 = arith.constant 9 : index
    %c0_23 = arith.constant 0 : index
    %36 = vector.load %arg4[%c0_21, %c9_22, %c0_23] : memref<1x24x128xi32, #tpu.memory_space<vmem>>, vector<1x1x128xi32>
    %37 = vector.shape_cast %36 : vector<1x1x128xi32> to vector<1x128xi32>
    %38 = vector.shape_cast %35 : vector<1x128xi32> to vector<1x1x128xi32>
    tpu.vector_store %arg4[%c0_21, %c9_22, %c0_23], %38 {strides = array<i32>} : memref<1x24x128xi32, #tpu.memory_space<vmem>>, vector<1x1x128xi32>,
    %c1_i32 = arith.constant 1 : i32
    %39 = vector.broadcast %c1_i32 : i32 to vector<32x128xi32>
    %40 = arith.cmpi eq, %4, %39 : vector<32x128xi32>
    %c0_24 = arith.constant 0 : index
    %c1 = arith.constant 1 : index
    %c0_25 = arith.constant 0 : index
    %41 = vector.load %arg4[%c0_24, %c1, %c0_25] : memref<1x24x128xi32, #tpu.memory_space<vmem>>, vector<1x1x128xi32>
    %42 = vector.shape_cast %41 : vector<1x1x128xi32> to vector<1x128xi32>
    %43 = arith.extui %40 : vector<32x128xi1> to vector<32x128xi32>
    %cst_26 = arith.constant dense<0> : vector<128xi32>
    %44 = vector.multi_reduction <add>, %43, %cst_26 [0] : vector<32x128xi32> to vector<128xi32>
    %45 = vector.shape_cast %44 : vector<128xi32> to vector<1x128xi32>
    %46 = arith.addi %42, %45 : vector<1x128xi32>
    %c0_27 = arith.constant 0 : index
    %c1_28 = arith.constant 1 : index
    %c0_29 = arith.constant 0 : index
    %47 = vector.load %arg4[%c0_27, %c1_28, %c0_29] : memref<1x24x128xi32, #tpu.memory_space<vmem>>, vector<1x1x128xi32>
    %48 = vector.shape_cast %47 : vector<1x1x128xi32> to vector<1x128xi32>
    %49 = vector.shape_cast %46 : vector<1x128xi32> to vector<1x1x128xi32>
    tpu.vector_store %arg4[%c0_27, %c1_28, %c0_29], %49 {strides = array<i32>} : memref<1x24x128xi32, #tpu.memory_space<vmem>>, vector<1x1x128xi32>,
    %c0_30 = arith.constant 0 : index
    %c10 = arith.constant 10 : index
    %c0_31 = arith.constant 0 : index
    %50 = vector.load %arg4[%c0_30, %c10, %c0_31] : memref<1x24x128xi32, #tpu.memory_space<vmem>>, vector<1x1x128xi32>
    %51 = vector.shape_cast %50 : vector<1x1x128xi32> to vector<1x128xi32>
    %52 = arith.andi %40, %8 : vector<32x128xi1>
    %53 = arith.extui %52 : vector<32x128xi1> to vector<32x128xi32>
    %cst_32 = arith.constant dense<0> : vector<128xi32>
    %54 = vector.multi_reduction <add>, %53, %cst_32 [0] : vector<32x128xi32> to vector<128xi32>
    %55 = vector.shape_cast %54 : vector<128xi32> to vector<1x128xi32>
    %56 = arith.addi %51, %55 : vector<1x128xi32>
    %c0_33 = arith.constant 0 : index
    %c10_34 = arith.constant 10 : index
    %c0_35 = arith.constant 0 : index
    %57 = vector.load %arg4[%c0_33, %c10_34, %c0_35] : memref<1x24x128xi32, #tpu.memory_space<vmem>>, vector<1x1x128xi32>
    %58 = vector.shape_cast %57 : vector<1x1x128xi32> to vector<1x128xi32>
    %59 = vector.shape_cast %56 : vector<1x128xi32> to vector<1x1x128xi32>
    tpu.vector_store %arg4[%c0_33, %c10_34, %c0_35], %59 {strides = array<i32>} : memref<1x24x128xi32, #tpu.memory_space<vmem>>, vector<1x1x128xi32>,
    %c2_i32 = arith.constant 2 : i32
    %60 = vector.broadcast %c2_i32 : i32 to vector<32x128xi32>
    %61 = arith.cmpi eq, %4, %60 : vector<32x128xi32>
    %c0_36 = arith.constant 0 : index
    %c2 = arith.constant 2 : index
    %c0_37 = arith.constant 0 : index
    %62 = vector.load %arg4[%c0_36, %c2, %c0_37] : memref<1x24x128xi32, #tpu.memory_space<vmem>>, vector<1x1x128xi32>
    %63 = vector.shape_cast %62 : vector<1x1x128xi32> to vector<1x128xi32>
    %64 = arith.extui %61 : vector<32x128xi1> to vector<32x128xi32>
    %cst_38 = arith.constant dense<0> : vector<128xi32>
    %65 = vector.multi_reduction <add>, %64, %cst_38 [0] : vector<32x128xi32> to vector<128xi32>
    %66 = vector.shape_cast %65 : vector<128xi32> to vector<1x128xi32>
    %67 = arith.addi %63, %66 : vector<1x128xi32>
    %c0_39 = arith.constant 0 : index
    %c2_40 = arith.constant 2 : index
    %c0_41 = arith.constant 0 : index
    %68 = vector.load %arg4[%c0_39, %c2_40, %c0_41] : memref<1x24x128xi32, #tpu.memory_space<vmem>>, vector<1x1x128xi32>
    %69 = vector.shape_cast %68 : vector<1x1x128xi32> to vector<1x128xi32>
    %70 = vector.shape_cast %67 : vector<1x128xi32> to vector<1x1x128xi32>
    tpu.vector_store %arg4[%c0_39, %c2_40, %c0_41], %70 {strides = array<i32>} : memref<1x24x128xi32, #tpu.memory_space<vmem>>, vector<1x1x128xi32>,
    %c0_42 = arith.constant 0 : index
    %c11 = arith.constant 11 : index
    %c0_43 = arith.constant 0 : index
    %71 = vector.load %arg4[%c0_42, %c11, %c0_43] : memref<1x24x128xi32, #tpu.memory_space<vmem>>, vector<1x1x128xi32>
    %72 = vector.shape_cast %71 : vector<1x1x128xi32> to vector<1x128xi32>
    %73 = arith.andi %61, %8 : vector<32x128xi1>
    %74 = arith.extui %73 : vector<32x128xi1> to vector<32x128xi32>
    %cst_44 = arith.constant dense<0> : vector<128xi32>
    %75 = vector.multi_reduction <add>, %74, %cst_44 [0] : vector<32x128xi32> to vector<128xi32>
    %76 = vector.shape_cast %75 : vector<128xi32> to vector<1x128xi32>
    %77 = arith.addi %72, %76 : vector<1x128xi32>
    %c0_45 = arith.constant 0 : index
    %c11_46 = arith.constant 11 : index
    %c0_47 = arith.constant 0 : index
    %78 = vector.load %arg4[%c0_45, %c11_46, %c0_47] : memref<1x24x128xi32, #tpu.memory_space<vmem>>, vector<1x1x128xi32>
    %79 = vector.shape_cast %78 : vector<1x1x128xi32> to vector<1x128xi32>
    %80 = vector.shape_cast %77 : vector<1x128xi32> to vector<1x1x128xi32>
    tpu.vector_store %arg4[%c0_45, %c11_46, %c0_47], %80 {strides = array<i32>} : memref<1x24x128xi32, #tpu.memory_space<vmem>>, vector<1x1x128xi32>,
    %c3_i32 = arith.constant 3 : i32
    %81 = vector.broadcast %c3_i32 : i32 to vector<32x128xi32>
    %82 = arith.cmpi eq, %4, %81 : vector<32x128xi32>
    %c0_48 = arith.constant 0 : index
    %c3 = arith.constant 3 : index
    %c0_49 = arith.constant 0 : index
    %83 = vector.load %arg4[%c0_48, %c3, %c0_49] : memref<1x24x128xi32, #tpu.memory_space<vmem>>, vector<1x1x128xi32>
    %84 = vector.shape_cast %83 : vector<1x1x128xi32> to vector<1x128xi32>
    %85 = arith.extui %82 : vector<32x128xi1> to vector<32x128xi32>
    %cst_50 = arith.constant dense<0> : vector<128xi32>
    %86 = vector.multi_reduction <add>, %85, %cst_50 [0] : vector<32x128xi32> to vector<128xi32>
    %87 = vector.shape_cast %86 : vector<128xi32> to vector<1x128xi32>
    %88 = arith.addi %84, %87 : vector<1x128xi32>
    %c0_51 = arith.constant 0 : index
    %c3_52 = arith.constant 3 : index
    %c0_53 = arith.constant 0 : index
    %89 = vector.load %arg4[%c0_51, %c3_52, %c0_53] : memref<1x24x128xi32, #tpu.memory_space<vmem>>, vector<1x1x128xi32>
    %90 = vector.shape_cast %89 : vector<1x1x128xi32> to vector<1x128xi32>
    %91 = vector.shape_cast %88 : vector<1x128xi32> to vector<1x1x128xi32>
    tpu.vector_store %arg4[%c0_51, %c3_52, %c0_53], %91 {strides = array<i32>} : memref<1x24x128xi32, #tpu.memory_space<vmem>>, vector<1x1x128xi32>,
    %c0_54 = arith.constant 0 : index
    %c12 = arith.constant 12 : index
    %c0_55 = arith.constant 0 : index
    %92 = vector.load %arg4[%c0_54, %c12, %c0_55] : memref<1x24x128xi32, #tpu.memory_space<vmem>>, vector<1x1x128xi32>
    %93 = vector.shape_cast %92 : vector<1x1x128xi32> to vector<1x128xi32>
    %94 = arith.andi %82, %8 : vector<32x128xi1>
    %95 = arith.extui %94 : vector<32x128xi1> to vector<32x128xi32>
    %cst_56 = arith.constant dense<0> : vector<128xi32>
    %96 = vector.multi_reduction <add>, %95, %cst_56 [0] : vector<32x128xi32> to vector<128xi32>
    %97 = vector.shape_cast %96 : vector<128xi32> to vector<1x128xi32>
    %98 = arith.addi %93, %97 : vector<1x128xi32>
    %c0_57 = arith.constant 0 : index
    %c12_58 = arith.constant 12 : index
    %c0_59 = arith.constant 0 : index
    %99 = vector.load %arg4[%c0_57, %c12_58, %c0_59] : memref<1x24x128xi32, #tpu.memory_space<vmem>>, vector<1x1x128xi32>
    %100 = vector.shape_cast %99 : vector<1x1x128xi32> to vector<1x128xi32>
    %101 = vector.shape_cast %98 : vector<1x128xi32> to vector<1x1x128xi32>
    tpu.vector_store %arg4[%c0_57, %c12_58, %c0_59], %101 {strides = array<i32>} : memref<1x24x128xi32, #tpu.memory_space<vmem>>, vector<1x1x128xi32>,
    %c4_i32 = arith.constant 4 : i32
    %102 = vector.broadcast %c4_i32 : i32 to vector<32x128xi32>
    %103 = arith.cmpi eq, %4, %102 : vector<32x128xi32>
    %c0_60 = arith.constant 0 : index
    %c4 = arith.constant 4 : index
    %c0_61 = arith.constant 0 : index
    %104 = vector.load %arg4[%c0_60, %c4, %c0_61] : memref<1x24x128xi32, #tpu.memory_space<vmem>>, vector<1x1x128xi32>
    %105 = vector.shape_cast %104 : vector<1x1x128xi32> to vector<1x128xi32>
    %106 = arith.extui %103 : vector<32x128xi1> to vector<32x128xi32>
    %cst_62 = arith.constant dense<0> : vector<128xi32>
    %107 = vector.multi_reduction <add>, %106, %cst_62 [0] : vector<32x128xi32> to vector<128xi32>
    %108 = vector.shape_cast %107 : vector<128xi32> to vector<1x128xi32>
    %109 = arith.addi %105, %108 : vector<1x128xi32>
    %c0_63 = arith.constant 0 : index
    %c4_64 = arith.constant 4 : index
    %c0_65 = arith.constant 0 : index
    %110 = vector.load %arg4[%c0_63, %c4_64, %c0_65] : memref<1x24x128xi32, #tpu.memory_space<vmem>>, vector<1x1x128xi32>
    %111 = vector.shape_cast %110 : vector<1x1x128xi32> to vector<1x128xi32>
    %112 = vector.shape_cast %109 : vector<1x128xi32> to vector<1x1x128xi32>
    tpu.vector_store %arg4[%c0_63, %c4_64, %c0_65], %112 {strides = array<i32>} : memref<1x24x128xi32, #tpu.memory_space<vmem>>, vector<1x1x128xi32>,
    %c0_66 = arith.constant 0 : index
    %c13 = arith.constant 13 : index
    %c0_67 = arith.constant 0 : index
    %113 = vector.load %arg4[%c0_66, %c13, %c0_67] : memref<1x24x128xi32, #tpu.memory_space<vmem>>, vector<1x1x128xi32>
    %114 = vector.shape_cast %113 : vector<1x1x128xi32> to vector<1x128xi32>
    %115 = arith.andi %103, %8 : vector<32x128xi1>
    %116 = arith.extui %115 : vector<32x128xi1> to vector<32x128xi32>
    %cst_68 = arith.constant dense<0> : vector<128xi32>
    %117 = vector.multi_reduction <add>, %116, %cst_68 [0] : vector<32x128xi32> to vector<128xi32>
    %118 = vector.shape_cast %117 : vector<128xi32> to vector<1x128xi32>
    %119 = arith.addi %114, %118 : vector<1x128xi32>
    %c0_69 = arith.constant 0 : index
    %c13_70 = arith.constant 13 : index
    %c0_71 = arith.constant 0 : index
    %120 = vector.load %arg4[%c0_69, %c13_70, %c0_71] : memref<1x24x128xi32, #tpu.memory_space<vmem>>, vector<1x1x128xi32>
    %121 = vector.shape_cast %120 : vector<1x1x128xi32> to vector<1x128xi32>
    %122 = vector.shape_cast %119 : vector<1x128xi32> to vector<1x1x128xi32>
    tpu.vector_store %arg4[%c0_69, %c13_70, %c0_71], %122 {strides = array<i32>} : memref<1x24x128xi32, #tpu.memory_space<vmem>>, vector<1x1x128xi32>,
    %c5_i32 = arith.constant 5 : i32
    %123 = vector.broadcast %c5_i32 : i32 to vector<32x128xi32>
    %124 = arith.cmpi eq, %4, %123 : vector<32x128xi32>
    %c0_72 = arith.constant 0 : index
    %c5 = arith.constant 5 : index
    %c0_73 = arith.constant 0 : index
    %125 = vector.load %arg4[%c0_72, %c5, %c0_73] : memref<1x24x128xi32, #tpu.memory_space<vmem>>, vector<1x1x128xi32>
    %126 = vector.shape_cast %125 : vector<1x1x128xi32> to vector<1x128xi32>
    %127 = arith.extui %124 : vector<32x128xi1> to vector<32x128xi32>
    %cst_74 = arith.constant dense<0> : vector<128xi32>
    %128 = vector.multi_reduction <add>, %127, %cst_74 [0] : vector<32x128xi32> to vector<128xi32>
    %129 = vector.shape_cast %128 : vector<128xi32> to vector<1x128xi32>
    %130 = arith.addi %126, %129 : vector<1x128xi32>
    %c0_75 = arith.constant 0 : index
    %c5_76 = arith.constant 5 : index
    %c0_77 = arith.constant 0 : index
    %131 = vector.load %arg4[%c0_75, %c5_76, %c0_77] : memref<1x24x128xi32, #tpu.memory_space<vmem>>, vector<1x1x128xi32>
    %132 = vector.shape_cast %131 : vector<1x1x128xi32> to vector<1x128xi32>
    %133 = vector.shape_cast %130 : vector<1x128xi32> to vector<1x1x128xi32>
    tpu.vector_store %arg4[%c0_75, %c5_76, %c0_77], %133 {strides = array<i32>} : memref<1x24x128xi32, #tpu.memory_space<vmem>>, vector<1x1x128xi32>,
    %c0_78 = arith.constant 0 : index
    %c14 = arith.constant 14 : index
    %c0_79 = arith.constant 0 : index
    %134 = vector.load %arg4[%c0_78, %c14, %c0_79] : memref<1x24x128xi32, #tpu.memory_space<vmem>>, vector<1x1x128xi32>
    %135 = vector.shape_cast %134 : vector<1x1x128xi32> to vector<1x128xi32>
    %136 = arith.andi %124, %8 : vector<32x128xi1>
    %137 = arith.extui %136 : vector<32x128xi1> to vector<32x128xi32>
    %cst_80 = arith.constant dense<0> : vector<128xi32>
    %138 = vector.multi_reduction <add>, %137, %cst_80 [0] : vector<32x128xi32> to vector<128xi32>
    %139 = vector.shape_cast %138 : vector<128xi32> to vector<1x128xi32>
    %140 = arith.addi %135, %139 : vector<1x128xi32>
    %c0_81 = arith.constant 0 : index
    %c14_82 = arith.constant 14 : index
    %c0_83 = arith.constant 0 : index
    %141 = vector.load %arg4[%c0_81, %c14_82, %c0_83] : memref<1x24x128xi32, #tpu.memory_space<vmem>>, vector<1x1x128xi32>
    %142 = vector.shape_cast %141 : vector<1x1x128xi32> to vector<1x128xi32>
    %143 = vector.shape_cast %140 : vector<1x128xi32> to vector<1x1x128xi32>
    tpu.vector_store %arg4[%c0_81, %c14_82, %c0_83], %143 {strides = array<i32>} : memref<1x24x128xi32, #tpu.memory_space<vmem>>, vector<1x1x128xi32>,
    %c6_i32 = arith.constant 6 : i32
    %144 = vector.broadcast %c6_i32 : i32 to vector<32x128xi32>
    %145 = arith.cmpi eq, %4, %144 : vector<32x128xi32>
    %c0_84 = arith.constant 0 : index
    %c6 = arith.constant 6 : index
    %c0_85 = arith.constant 0 : index
    %146 = vector.load %arg4[%c0_84, %c6, %c0_85] : memref<1x24x128xi32, #tpu.memory_space<vmem>>, vector<1x1x128xi32>
    %147 = vector.shape_cast %146 : vector<1x1x128xi32> to vector<1x128xi32>
    %148 = arith.extui %145 : vector<32x128xi1> to vector<32x128xi32>
    %cst_86 = arith.constant dense<0> : vector<128xi32>
    %149 = vector.multi_reduction <add>, %148, %cst_86 [0] : vector<32x128xi32> to vector<128xi32>
    %150 = vector.shape_cast %149 : vector<128xi32> to vector<1x128xi32>
    %151 = arith.addi %147, %150 : vector<1x128xi32>
    %c0_87 = arith.constant 0 : index
    %c6_88 = arith.constant 6 : index
    %c0_89 = arith.constant 0 : index
    %152 = vector.load %arg4[%c0_87, %c6_88, %c0_89] : memref<1x24x128xi32, #tpu.memory_space<vmem>>, vector<1x1x128xi32>
    %153 = vector.shape_cast %152 : vector<1x1x128xi32> to vector<1x128xi32>
    %154 = vector.shape_cast %151 : vector<1x128xi32> to vector<1x1x128xi32>
    tpu.vector_store %arg4[%c0_87, %c6_88, %c0_89], %154 {strides = array<i32>} : memref<1x24x128xi32, #tpu.memory_space<vmem>>, vector<1x1x128xi32>,
    %c0_90 = arith.constant 0 : index
    %c15 = arith.constant 15 : index
    %c0_91 = arith.constant 0 : index
    %155 = vector.load %arg4[%c0_90, %c15, %c0_91] : memref<1x24x128xi32, #tpu.memory_space<vmem>>, vector<1x1x128xi32>
    %156 = vector.shape_cast %155 : vector<1x1x128xi32> to vector<1x128xi32>
    %157 = arith.andi %145, %8 : vector<32x128xi1>
    %158 = arith.extui %157 : vector<32x128xi1> to vector<32x128xi32>
    %cst_92 = arith.constant dense<0> : vector<128xi32>
    %159 = vector.multi_reduction <add>, %158, %cst_92 [0] : vector<32x128xi32> to vector<128xi32>
    %160 = vector.shape_cast %159 : vector<128xi32> to vector<1x128xi32>
    %161 = arith.addi %156, %160 : vector<1x128xi32>
    %c0_93 = arith.constant 0 : index
    %c15_94 = arith.constant 15 : index
    %c0_95 = arith.constant 0 : index
    %162 = vector.load %arg4[%c0_93, %c15_94, %c0_95] : memref<1x24x128xi32, #tpu.memory_space<vmem>>, vector<1x1x128xi32>
    %163 = vector.shape_cast %162 : vector<1x1x128xi32> to vector<1x128xi32>
    %164 = vector.shape_cast %161 : vector<1x128xi32> to vector<1x1x128xi32>
    tpu.vector_store %arg4[%c0_93, %c15_94, %c0_95], %164 {strides = array<i32>} : memref<1x24x128xi32, #tpu.memory_space<vmem>>, vector<1x1x128xi32>,
    %c7_i32 = arith.constant 7 : i32
    %165 = vector.broadcast %c7_i32 : i32 to vector<32x128xi32>
    %166 = arith.cmpi eq, %4, %165 : vector<32x128xi32>
    %c0_96 = arith.constant 0 : index
    %c7 = arith.constant 7 : index
    %c0_97 = arith.constant 0 : index
    %167 = vector.load %arg4[%c0_96, %c7, %c0_97] : memref<1x24x128xi32, #tpu.memory_space<vmem>>, vector<1x1x128xi32>
    %168 = vector.shape_cast %167 : vector<1x1x128xi32> to vector<1x128xi32>
    %169 = arith.extui %166 : vector<32x128xi1> to vector<32x128xi32>
    %cst_98 = arith.constant dense<0> : vector<128xi32>
    %170 = vector.multi_reduction <add>, %169, %cst_98 [0] : vector<32x128xi32> to vector<128xi32>
    %171 = vector.shape_cast %170 : vector<128xi32> to vector<1x128xi32>
    %172 = arith.addi %168, %171 : vector<1x128xi32>
    %c0_99 = arith.constant 0 : index
    %c7_100 = arith.constant 7 : index
    %c0_101 = arith.constant 0 : index
    %173 = vector.load %arg4[%c0_99, %c7_100, %c0_101] : memref<1x24x128xi32, #tpu.memory_space<vmem>>, vector<1x1x128xi32>
    %174 = vector.shape_cast %173 : vector<1x1x128xi32> to vector<1x128xi32>
    %175 = vector.shape_cast %172 : vector<1x128xi32> to vector<1x1x128xi32>
    tpu.vector_store %arg4[%c0_99, %c7_100, %c0_101], %175 {strides = array<i32>} : memref<1x24x128xi32, #tpu.memory_space<vmem>>, vector<1x1x128xi32>,
    %c0_102 = arith.constant 0 : index
    %c16 = arith.constant 16 : index
    %c0_103 = arith.constant 0 : index
    %176 = vector.load %arg4[%c0_102, %c16, %c0_103] : memref<1x24x128xi32, #tpu.memory_space<vmem>>, vector<1x1x128xi32>
    %177 = vector.shape_cast %176 : vector<1x1x128xi32> to vector<1x128xi32>
    %178 = arith.andi %166, %8 : vector<32x128xi1>
    %179 = arith.extui %178 : vector<32x128xi1> to vector<32x128xi32>
    %cst_104 = arith.constant dense<0> : vector<128xi32>
    %180 = vector.multi_reduction <add>, %179, %cst_104 [0] : vector<32x128xi32> to vector<128xi32>
    %181 = vector.shape_cast %180 : vector<128xi32> to vector<1x128xi32>
    %182 = arith.addi %177, %181 : vector<1x128xi32>
    %c0_105 = arith.constant 0 : index
    %c16_106 = arith.constant 16 : index
    %c0_107 = arith.constant 0 : index
    %183 = vector.load %arg4[%c0_105, %c16_106, %c0_107] : memref<1x24x128xi32, #tpu.memory_space<vmem>>, vector<1x1x128xi32>
    %184 = vector.shape_cast %183 : vector<1x1x128xi32> to vector<1x128xi32>
    %185 = vector.shape_cast %182 : vector<1x128xi32> to vector<1x1x128xi32>
    tpu.vector_store %arg4[%c0_105, %c16_106, %c0_107], %185 {strides = array<i32>} : memref<1x24x128xi32, #tpu.memory_space<vmem>>, vector<1x1x128xi32>,
    %c8_i32 = arith.constant 8 : i32
    %186 = vector.broadcast %c8_i32 : i32 to vector<32x128xi32>
    %187 = arith.cmpi eq, %4, %186 : vector<32x128xi32>
    %c0_108 = arith.constant 0 : index
    %c8 = arith.constant 8 : index
    %c0_109 = arith.constant 0 : index
    %188 = vector.load %arg4[%c0_108, %c8, %c0_109] : memref<1x24x128xi32, #tpu.memory_space<vmem>>, vector<1x1x128xi32>
    %189 = vector.shape_cast %188 : vector<1x1x128xi32> to vector<1x128xi32>
    %190 = arith.extui %187 : vector<32x128xi1> to vector<32x128xi32>
    %cst_110 = arith.constant dense<0> : vector<128xi32>
    %191 = vector.multi_reduction <add>, %190, %cst_110 [0] : vector<32x128xi32> to vector<128xi32>
    %192 = vector.shape_cast %191 : vector<128xi32> to vector<1x128xi32>
    %193 = arith.addi %189, %192 : vector<1x128xi32>
    %c0_111 = arith.constant 0 : index
    %c8_112 = arith.constant 8 : index
    %c0_113 = arith.constant 0 : index
    %194 = vector.load %arg4[%c0_111, %c8_112, %c0_113] : memref<1x24x128xi32, #tpu.memory_space<vmem>>, vector<1x1x128xi32>
    %195 = vector.shape_cast %194 : vector<1x1x128xi32> to vector<1x128xi32>
    %196 = vector.shape_cast %193 : vector<1x128xi32> to vector<1x1x128xi32>
    tpu.vector_store %arg4[%c0_111, %c8_112, %c0_113], %196 {strides = array<i32>} : memref<1x24x128xi32, #tpu.memory_space<vmem>>, vector<1x1x128xi32>,
    %c0_114 = arith.constant 0 : index
    %c17 = arith.constant 17 : index
    %c0_115 = arith.constant 0 : index
    %197 = vector.load %arg4[%c0_114, %c17, %c0_115] : memref<1x24x128xi32, #tpu.memory_space<vmem>>, vector<1x1x128xi32>
    %198 = vector.shape_cast %197 : vector<1x1x128xi32> to vector<1x128xi32>
    %199 = arith.andi %187, %8 : vector<32x128xi1>
    %200 = arith.extui %199 : vector<32x128xi1> to vector<32x128xi32>
    %cst_116 = arith.constant dense<0> : vector<128xi32>
    %201 = vector.multi_reduction <add>, %200, %cst_116 [0] : vector<32x128xi32> to vector<128xi32>
    %202 = vector.shape_cast %201 : vector<128xi32> to vector<1x128xi32>
    %203 = arith.addi %198, %202 : vector<1x128xi32>
    %c0_117 = arith.constant 0 : index
    %c17_118 = arith.constant 17 : index
    %c0_119 = arith.constant 0 : index
    %204 = vector.load %arg4[%c0_117, %c17_118, %c0_119] : memref<1x24x128xi32, #tpu.memory_space<vmem>>, vector<1x1x128xi32>
    %205 = vector.shape_cast %204 : vector<1x1x128xi32> to vector<1x128xi32>
    %206 = vector.shape_cast %203 : vector<1x128xi32> to vector<1x1x128xi32>
    tpu.vector_store %arg4[%c0_117, %c17_118, %c0_119], %206 {strides = array<i32>} : memref<1x24x128xi32, #tpu.memory_space<vmem>>, vector<1x1x128xi32>,
    return
  }
  func.func @transform_0(%arg0: i32, %arg1: i32) -> (i32, i32) {
    %c1_i32 = arith.constant 1 : i32
    %0 = arith.muli %arg0, %c1_i32 : i32
    %1 = arith.addi %0, %arg1 : i32
    %c0_i32 = arith.constant 0 : i32
    %c0_i32_0 = arith.constant 0 : i32
    return %1, %c0_i32 : i32, i32
  }
  func.func @transform_1(%arg0: i32, %arg1: i32) -> (i32, i32) {
    %c1_i32 = arith.constant 1 : i32
    %0 = arith.muli %arg0, %c1_i32 : i32
    %1 = arith.addi %0, %arg1 : i32
    %c0_i32 = arith.constant 0 : i32
    %c0_i32_0 = arith.constant 0 : i32
    return %1, %c0_i32 : i32, i32
  }
  func.func @transform_2(%arg0: i32, %arg1: i32) -> (i32, i32, i32) {
    %c0_i32 = arith.constant 0 : i32
    %c0_i32_0 = arith.constant 0 : i32
    %c0_i32_1 = arith.constant 0 : i32
    return %arg0, %c0_i32, %c0_i32_0 : i32, i32, i32
  }
}

</mosaic_0001>

<llo_original>
// kernel: tpu_custom_call.1
$region0: #{tpu_custom_call.1}
  #allocation0 [shape = 'u32[]', space=smem, size = 0x4, offset = 0x4, fixed_abs, tag = 'smem constant byte address 0x4 - core index']
  #allocation1 [shape = 'u32[144,128]{1,0:T(1,128)}', space=vmem, size = 0x12000, scoped, tag = 'internal scratch']
  %s0 = inlined_call_operand.hbm [shape: s8[64,128], index: 0, kind: input, shape index: {}]
  %s1 = inlined_call_operand.hbm [shape: s8[64,128], index: 1, kind: input, shape index: {}]
  %s2 = inlined_call_operand.hbm [shape: s32[2,24,128], index: 2, kind: output, shape index: {}]
  %s3 = sld [smem:[#allocation0]]
  $region53: #{tpu_custom_call.1} parent=0
    _
  %s5 = ssub.s32 1, %s3
  %s6 = scalar_select 0, %s5, %s3
  $region1: #{tpu_custom_call.1} parent=0
    #allocation2 [shape = 'u8[8192]{0}', space=vmem, size = 0x2000, scoped, tag = 'input window, operand 0']
    #allocation3 [shape = 's32[2]{0}', space=sflag, size = 0x8, scoped, tag = 'scoped memory for tpu_custom_call.1']
    #allocation4 [shape = 's32[2]{0}', space=sflag, size = 0x8, scoped, tag = 'scoped memory for tpu_custom_call.1']
    #allocation5 [shape = 'u8[8192]{0}', space=vmem, size = 0x2000, scoped, tag = 'input window, operand 1']
    #allocation6 [shape = 's32[2]{0}', space=sflag, size = 0x8, scoped, tag = 'scoped memory for tpu_custom_call.1']
    #allocation7 [shape = 'u8[24576]{0}', space=vmem, size = 0x6000, scoped, tag = 'output window, operand 0']
    %7 = vsyncpa [#allocation3], 0
    %s8 = scalar_lea.sflag [#allocation3], 1
    %9 = vsyncpa %s8, 0
    %10 = vsyncpa [#allocation6], 0
    %s11 = scalar_lea.sflag [#allocation6], 1
    %12 = vsyncpa %s11, 0
    %13 = vsyncpa [#allocation4], 0
    %s14 = scalar_lea.sflag [#allocation4], 1
    %15 = vsyncpa %s14, 0
    loop: start=0, step=1, limit=4
    $region2: #{tpu_custom_call.1} parent=1 // loop_pre_header
      _
    $region3: #{tpu_custom_call.1} parent=1 // loop_header
      %s17 = sphi 0, %s21
      %p18 = scmp.ge.s32.totalorder %s17, 4
      %s24 = sphi 0, %s36
      %s25 = sphi 0, %s32
      %s26 = sphi 0, %s24
      %s27 = sphi 0, %s25
      %s28 = sphi 0, %s26
      %s29 = sphi 0, %s27
      %s41 = sphi 0, %s43
      %s44 = sphi 0, %s41
      %s45 = sphi 0, %s44
      %s61 = sphi 0, %s45
      %s69 = sphi 0, %s71
      %s72 = sphi 0, %s69
      %s73 = sphi 0, %s72
      %s89 = sphi 0, %s73
      %s95 = sphi 0, %s97
      %s98 = sphi 0, %s95
      %s99 = sphi 0, %s98
      %s115 = sphi 0, %s99
    $region4: #{tpu_custom_call.1} parent=1 // loop_header_branch
      %20 = sbr.rel (%p18) target = $region8
    $region5: #{tpu_custom_call.1} parent=1 // loop_body
      %s22 = ssub.s32 %s17, 1
      %s23 = ssub.s32 %s17, 2
      %s30 = sadd.s32 1, %s25
      %p31 = scmp.ge.s32.totalorder %s30, 1
      %s32 = scalar_select %p31, 0, %s30
      %s33 = sadd.s32 1, %s24
      %s34 = scalar_select %p31, %s33, %s24
      %p35 = scmp.ge.s32.totalorder %s34, 2
      %s36 = scalar_select %p35, 0, %s34
      %s37 = sadd.s32 %s24, %s25
      %s38 = sadd.s32 %s36, %s32
      %s39 = ssub.s32 %s37, %s38
      %p40 = scmp.eq.s32.totalorder %s39, 0
      %s42 = sadd.s32 %s41, 1
      %s43 = scalar_select %p40, %s41, %s42
      %p46 = pneg %p40
      %p47 = scmp.eq.s32.totalorder %s17, 1
      %p48 = por %p46, %p47
      %p49 = scmp.ne.s32.totalorder %s41, %s44
      %p50 = scmp.eq.s32.totalorder %s17, 0
      %p51 = por %p49, %p50
      %p52 = scmp.ne.s32.totalorder %s41, %s44
      %p53 = scmp.eq.s32.totalorder %s22, 1
      %p54 = por %p52, %p53
      %p55 = scmp.ne.s32.totalorder %s44, %s45
      %p56 = scmp.eq.s32.totalorder %s22, 0
      %p57 = por %p55, %p56
      %p58 = scmp.ne.s32.totalorder %s44, %s45
      %p59 = scmp.eq.s32.totalorder %s23, 1
      %p60 = por %p58, %p59
      %p62 = scmp.ne.s32.totalorder %s45, %s61
      %p63 = scmp.eq.s32.totalorder %s23, 0
      %p64 = por %p62, %p63
      %s65 = sadd.s32 %s24, %s25
      %s66 = sadd.s32 %s36, %s32
      %s67 = ssub.s32 %s65, %s66
      %p68 = scmp.eq.s32.totalorder %s67, 0
      %s70 = sadd.s32 %s69, 1
      %s71 = scalar_select %p68, %s69, %s70
      %p74 = pneg %p68
      %p75 = scmp.eq.s32.totalorder %s17, 1
      %p76 = por %p74, %p75
      %p77 = scmp.ne.s32.totalorder %s69, %s72
      %p78 = scmp.eq.s32.totalorder %s17, 0
      %p79 = por %p77, %p78
      %p80 = scmp.ne.s32.totalorder %s69, %s72
      %p81 = scmp.eq.s32.totalorder %s22, 1
      %p82 = por %p80, %p81
      %p83 = scmp.ne.s32.totalorder %s72, %s73
      %p84 = scmp.eq.s32.totalorder %s22, 0
      %p85 = por %p83, %p84
      %p86 = scmp.ne.s32.totalorder %s72, %s73
      %p87 = scmp.eq.s32.totalorder %s23, 1
      %p88 = por %p86, %p87
      %p90 = scmp.ne.s32.totalorder %s73, %s89
      %p91 = scmp.eq.s32.totalorder %s23, 0
      %p92 = por %p90, %p91
      %s93 = ssub.s32 %s24, %s36
      %p94 = scmp.eq.s32.totalorder %s93, 0
      %s96 = sadd.s32 %s95, 1
      %s97 = scalar_select %p94, %s95, %s96
      %p100 = pneg %p94
      %p101 = scmp.eq.s32.totalorder %s17, 1
      %p102 = por %p100, %p101
      %p103 = scmp.ne.s32.totalorder %s95, %s98
      %p104 = scmp.eq.s32.totalorder %s17, 0
      %p105 = por %p103, %p104
      %p106 = scmp.ne.s32.totalorder %s95, %s98
      %p107 = scmp.eq.s32.totalorder %s22, 1
      %p108 = por %p106, %p107
      %p109 = scmp.ne.s32.totalorder %s98, %s99
      %p110 = scmp.eq.s32.totalorder %s22, 0
      %p111 = por %p109, %p110
      %p112 = scmp.ne.s32.totalorder %s98, %s99
      %p113 = scmp.eq.s32.totalorder %s23, 1
      %p114 = por %p112, %p113
      %p116 = scmp.ne.s32.totalorder %s99, %s115
      %p117 = scmp.eq.s32.totalorder %s23, 0
      %p118 = por %p116, %p117
      %p119 = scmp.le.s32.totalorder 1, %s17
      %p120 = scmp.lt.s32.totalorder %s17, 3
      %p121 = pnand %p119, %p120
      %p122 = pneg %p121
      // Predicated region
      $region9: #{tpu_custom_call.1} parent=5 // pred_check
        _
      $region10: #{tpu_custom_call.1} parent=5 // pred_check_branch
        %124 = sbr.rel (%p121) target = $region12
      $region11: #{tpu_custom_call.1} parent=5 // pred_region
        %s125 = ssub.s32 %s17, 1
      $region12: #{tpu_custom_call.1} parent=5 // pred_fallthru
        _
      %p126 = scmp.lt.s32.totalorder %s17, 2
      // Predicated region
      $region13: #{tpu_custom_call.1} parent=5 // pred_check
        %p127 = pneg %p126
      $region14: #{tpu_custom_call.1} parent=5 // pred_check_branch
        %129 = sbr.rel (%p127) target = $region16
      $region15: #{tpu_custom_call.1} parent=5 // pred_region
        // Predicated region
        $region17: #{tpu_custom_call.1} parent=15 // pred_check
          %p130 = pneg %p51
        $region18: #{tpu_custom_call.1} parent=15 // pred_check_branch
          %132 = sbr.rel (%p130) target = $region20
        $region19: #{tpu_custom_call.1} parent=15 // pred_region
          %s133 = sand.u32 %s41, 1
          %s134 = scalar_lea.sflag [#allocation3], %s133
          %s135 = sand.u32 %s41, 1
          %s136 = smul.addr %s135, 8
          %s137 = scalar_lea.vmem [#allocation2], %s136
          %s138 = sadd.s32 %s24, %s25
          %s140 = ssub.s32 128, 128
          %141 = vsyncadd %s134, %s140
          %s142 = smul.addr %s138, 128
          %s143 = scalar_lea.hbm %s0, %s142
          %s145 = sshll.u32 %s137, 4
          %s146 = int_to_ptr.vmem [resolvable:$true] %s145
          %148 = dma.hbm_to_vmem [thread:$0]  %s143, 128, %s146, %s134
        $region20: #{tpu_custom_call.1} parent=15 // pred_fallthru
          _
        // Predicated region
        $region21: #{tpu_custom_call.1} parent=15 // pred_check
          %p149 = pneg %p79
        $region22: #{tpu_custom_call.1} parent=15 // pred_check_branch
          %151 = sbr.rel (%p149) target = $region24
        $region23: #{tpu_custom_call.1} parent=15 // pred_region
          %s152 = sand.u32 %s69, 1
          %s153 = scalar_lea.sflag [#allocation6], %s152
          %s154 = sand.u32 %s69, 1
          %s155 = smul.addr %s154, 8
          %s156 = scalar_lea.vmem [#allocation5], %s155
          %s157 = sadd.s32 %s24, %s25
          %s159 = ssub.s32 128, 128
          %160 = vsyncadd %s153, %s159
          %s161 = smul.addr %s157, 128
          %s162 = scalar_lea.hbm %s1, %s161
          %s164 = sshll.u32 %s156, 4
          %s165 = int_to_ptr.vmem [resolvable:$true] %s164
          %167 = dma.hbm_to_vmem [thread:$0]  %s162, 128, %s165, %s153
        $region24: #{tpu_custom_call.1} parent=15 // pred_fallthru
          _
      $region16: #{tpu_custom_call.1} parent=5 // pred_fallthru
        _
      %p168 = scmp.le.s32.totalorder 1, %s17
      %p169 = scmp.lt.s32.totalorder %s17, 3
      %p170 = pnand %p168, %p169
      %p171 = pneg %p170
      // Predicated region
      $region25: #{tpu_custom_call.1} parent=5 // pred_check
        _
      $region26: #{tpu_custom_call.1} parent=5 // pred_check_branch
        %173 = sbr.rel (%p170) target = $region28
      $region27: #{tpu_custom_call.1} parent=5 // pred_region
        %s174 = ssub.s32 %s17, 1
        %s175 = sand.u32 %s44, 1
        %s176 = scalar_lea.sflag [#allocation3], %s175
        %s177 = sand.u32 %s44, 1
        %s178 = smul.addr %s177, 8
        %s179 = scalar_lea.vmem [#allocation2], %s178
        // Predicated region
        $region29: #{tpu_custom_call.1} parent=27 // pred_check
          %p180 = pneg %p57
        $region30: #{tpu_custom_call.1} parent=27 // pred_check_branch
          %182 = sbr.rel (%p180) target = $region32
        $region31: #{tpu_custom_call.1} parent=27 // pred_region
          %183 = dma.done %s176, 128
        $region32: #{tpu_custom_call.1} parent=27 // pred_fallthru
          _
        %s184 = sand.u32 %s72, 1
        %s185 = scalar_lea.sflag [#allocation6], %s184
        %s186 = sand.u32 %s72, 1
        %s187 = smul.addr %s186, 8
        %s188 = scalar_lea.vmem [#allocation5], %s187
        // Predicated region
        $region33: #{tpu_custom_call.1} parent=27 // pred_check
          %p189 = pneg %p85
        $region34: #{tpu_custom_call.1} parent=27 // pred_check_branch
          %191 = sbr.rel (%p189) target = $region36
        $region35: #{tpu_custom_call.1} parent=27 // pred_region
          %192 = dma.done %s185, 128
        $region36: #{tpu_custom_call.1} parent=27 // pred_fallthru
          _
        %s193 = sand.u32 %s44, 1
        %s194 = scalar_lea.sflag [#allocation3], %s193
        %s195 = sand.u32 %s44, 1
        %s196 = smul.addr %s195, 8
        %s197 = scalar_lea.vmem [#allocation2], %s196
        %p198 = pneg %p57
        %p199 = pneg %p54
        %s200 = sand.u32 %s72, 1
        %s201 = scalar_lea.sflag [#allocation6], %s200
        %s202 = sand.u32 %s72, 1
        %s203 = smul.addr %s202, 8
        %s204 = scalar_lea.vmem [#allocation5], %s203
        %p205 = pneg %p85
        %p206 = pneg %p82
        %p207 = pneg %p111
        %p208 = pneg %p108
        %s209 = sand.u32 %s98, 1
        %s210 = scalar_lea.sflag [#allocation4], %s209
        %s211 = sand.u32 %s98, 1
        %s212 = smul.addr %s211, 24
        %s213 = scalar_lea.vmem [#allocation7], %s212
        %s214 = sadd.s32 %s26, %s27
        %s215 = sadd.s32 %s26, %s27
        %p216 = scmp.eq.s32.totalorder %s27, 0
        // Predicated region
        $region37: #{tpu_custom_call.1} parent=27 // pred_check
          %p217 = pneg %p216
        $region38: #{tpu_custom_call.1} parent=27 // pred_check_branch
          %219 = sbr.rel (%p217) target = $region40
        $region39: #{tpu_custom_call.1} parent=27 // pred_region
          %220 = vst [vmem:[%s213] sm:$0xff] 0
          %221 = vst [vmem:[%s213 + $0x8] sm:$0xff] 0
          %222 = vst [vmem:[%s213 + $0x10] sm:$0xff] 0
        $region40: #{tpu_custom_call.1} parent=27 // pred_fallthru
          _
        %v223 = vld [vmem:[%s179] sm:$0xff]
        %v224 = vunpack.c.0.s8 %v223
        %v225 = vunpack.c.1.s8 %v223
        %v226 = vunpack.c.2.s8 %v223
        %v227 = vunpack.c.3.s8 %v223
        %v228 = vld [vmem:[%s188] sm:$0xff]
        %v229 = vunpack.c.0.s8 %v228
        %v230 = vunpack.c.1.s8 %v228
        %v231 = vunpack.c.2.s8 %v228
        %v232 = vunpack.c.3.s8 %v228
        %vm233 = vcmp.ne.s32.totalorder %v229, 0
        %vm234 = vcmp.ne.s32.totalorder %v230, 0
        %vm235 = vcmp.ne.s32.totalorder %v231, 0
        %vm236 = vcmp.ne.s32.totalorder %v232, 0
        %v237 = vld [vmem:[%s213 + $0x12] sm:$0x1]
        %v238 = vsel %vm233, 1, 0
        %v239 = vsel %vm234, 1, 0
        %v240 = vsel %vm235, 1, 0
        %v241 = vsel %vm236, 1, 0
        %v242 = vadd.s32 %v238, %v239
        %v243 = vadd.s32 %v240, %v241
        %v244 = vadd.s32 %v242, %v243
        %v245 = vrot.slane %v244, 4
        %v246 = vadd.s32 %v244, %v245
        %v247 = vrot.slane %v246, 2
        %v248 = vadd.s32 %v246, %v247
        %v249 = vrot.slane %v248, 1
        %v250 = vadd.s32 %v248, %v249
        %v251 = vadd.s32 %v237, %v250
        %252 = vst [vmem:[%s213 + $0x12] sm:$0x1] %v251
        %vm253 = vcmp.eq.s32.totalorder %v224, 0
        %vm254 = vcmp.eq.s32.totalorder %v225, 0
        %vm255 = vcmp.eq.s32.totalorder %v226, 0
        %vm256 = vcmp.eq.s32.totalorder %v227, 0
        %v257 = vld [vmem:[%s213] sm:$0x1]
        %v258 = vsel %vm253, 1, 0
        %v259 = vsel %vm254, 1, 0
        %v260 = vsel %vm255, 1, 0
        %v261 = vsel %vm256, 1, 0
        %v262 = vadd.s32 %v258, %v259
        %v263 = vadd.s32 %v260, %v261
        %v264 = vadd.s32 %v262, %v263
        %v265 = vrot.slane %v264, 4
        %v266 = vadd.s32 %v264, %v265
        %v267 = vrot.slane %v266, 2
        %v268 = vadd.s32 %v266, %v267
        %v269 = vrot.slane %v268, 1
        %v270 = vadd.s32 %v268, %v269
        %v271 = vadd.s32 %v257, %v270
        %272 = vst [vmem:[%s213] sm:$0x1] %v271
        %v273 = vld [vmem:[%s213 + $0x9] sm:$0x1]
        %vm274 = vmand %vm253, %vm233
        %vm275 = vmand %vm254, %vm234
        %vm276 = vmand %vm255, %vm235
        %vm277 = vmand %vm256, %vm236
        %v278 = vsel %vm274, 1, 0
        %v279 = vsel %vm275, 1, 0
        %v280 = vsel %vm276, 1, 0
        %v281 = vsel %vm277, 1, 0
        %v282 = vadd.s32 %v278, %v279
        %v283 = vadd.s32 %v280, %v281
        %v284 = vadd.s32 %v282, %v283
        %v285 = vrot.slane %v284, 4
        %v286 = vadd.s32 %v284, %v285
        %v287 = vrot.slane %v286, 2
        %v288 = vadd.s32 %v286, %v287
        %v289 = vrot.slane %v288, 1
        %v290 = vadd.s32 %v288, %v289
        %v291 = vadd.s32 %v273, %v290
        %292 = vst [vmem:[%s213 + $0x9] sm:$0x1] %v291
        %vm293 = vcmp.eq.s32.totalorder %v224, 1
        %vm294 = vcmp.eq.s32.totalorder %v225, 1
        %vm295 = vcmp.eq.s32.totalorder %v226, 1
        %vm296 = vcmp.eq.s32.totalorder %v227, 1
        %v297 = vld [vmem:[%s213 + $0x1] sm:$0x1]
        %v298 = vsel %vm293, 1, 0
        %v299 = vsel %vm294, 1, 0
        %v300 = vsel %vm295, 1, 0
        %v301 = vsel %vm296, 1, 0
        %v302 = vadd.s32 %v298, %v299
        %v303 = vadd.s32 %v300, %v301
        %v304 = vadd.s32 %v302, %v303
        %v305 = vrot.slane %v304, 4
        %v306 = vadd.s32 %v304, %v305
        %v307 = vrot.slane %v306, 2
        %v308 = vadd.s32 %v306, %v307
        %v309 = vrot.slane %v308, 1
        %v310 = vadd.s32 %v308, %v309
        %v311 = vadd.s32 %v297, %v310
        %312 = vst [vmem:[%s213 + $0x1] sm:$0x1] %v311
        %v313 = vld [vmem:[%s213 + $0xa] sm:$0x1]
        %vm314 = vmand %vm293, %vm233
        %vm315 = vmand %vm294, %vm234
        %vm316 = vmand %vm295, %vm235
        %vm317 = vmand %vm296, %vm236
        %v318 = vsel %vm314, 1, 0
        %v319 = vsel %vm315, 1, 0
        %v320 = vsel %vm316, 1, 0
        %v321 = vsel %vm317, 1, 0
        %v322 = vadd.s32 %v318, %v319
        %v323 = vadd.s32 %v320, %v321
        %v324 = vadd.s32 %v322, %v323
        %v325 = vrot.slane %v324, 4
        %v326 = vadd.s32 %v324, %v325
        %v327 = vrot.slane %v326, 2
        %v328 = vadd.s32 %v326, %v327
        %v329 = vrot.slane %v328, 1
        %v330 = vadd.s32 %v328, %v329
        %v331 = vadd.s32 %v313, %v330
        %332 = vst [vmem:[%s213 + $0xa] sm:$0x1] %v331
        %vm333 = vcmp.eq.s32.totalorder %v224, 2
        %vm334 = vcmp.eq.s32.totalorder %v225, 2
        %vm335 = vcmp.eq.s32.totalorder %v226, 2
        %vm336 = vcmp.eq.s32.totalorder %v227, 2
        %v337 = vld [vmem:[%s213 + $0x2] sm:$0x1]
        %v338 = vsel %vm333, 1, 0
        %v339 = vsel %vm334, 1, 0
        %v340 = vsel %vm335, 1, 0
        %v341 = vsel %vm336, 1, 0
        %v342 = vadd.s32 %v338, %v339
        %v343 = vadd.s32 %v340, %v341
        %v344 = vadd.s32 %v342, %v343
        %v345 = vrot.slane %v344, 4
        %v346 = vadd.s32 %v344, %v345
        %v347 = vrot.slane %v346, 2
        %v348 = vadd.s32 %v346, %v347
        %v349 = vrot.slane %v348, 1
        %v350 = vadd.s32 %v348, %v349
        %v351 = vadd.s32 %v337, %v350
        %352 = vst [vmem:[%s213 + $0x2] sm:$0x1] %v351
        %v353 = vld [vmem:[%s213 + $0xb] sm:$0x1]
        %vm354 = vmand %vm333, %vm233
        %vm355 = vmand %vm334, %vm234
        %vm356 = vmand %vm335, %vm235
        %vm357 = vmand %vm336, %vm236
        %v358 = vsel %vm354, 1, 0
        %v359 = vsel %vm355, 1, 0
        %v360 = vsel %vm356, 1, 0
        %v361 = vsel %vm357, 1, 0
        %v362 = vadd.s32 %v358, %v359
        %v363 = vadd.s32 %v360, %v361
        %v364 = vadd.s32 %v362, %v363
        %v365 = vrot.slane %v364, 4
        %v366 = vadd.s32 %v364, %v365
        %v367 = vrot.slane %v366, 2
        %v368 = vadd.s32 %v366, %v367
        %v369 = vrot.slane %v368, 1
        %v370 = vadd.s32 %v368, %v369
        %v371 = vadd.s32 %v353, %v370
        %372 = vst [vmem:[%s213 + $0xb] sm:$0x1] %v371
        %vm373 = vcmp.eq.s32.totalorder %v224, 3
        %vm374 = vcmp.eq.s32.totalorder %v225, 3
        %vm375 = vcmp.eq.s32.totalorder %v226, 3
        %vm376 = vcmp.eq.s32.totalorder %v227, 3
        %v377 = vld [vmem:[%s213 + $0x3] sm:$0x1]
        %v378 = vsel %vm373, 1, 0
        %v379 = vsel %vm374, 1, 0
        %v380 = vsel %vm375, 1, 0
        %v381 = vsel %vm376, 1, 0
        %v382 = vadd.s32 %v378, %v379
        %v383 = vadd.s32 %v380, %v381
        %v384 = vadd.s32 %v382, %v383
        %v385 = vrot.slane %v384, 4
        %v386 = vadd.s32 %v384, %v385
        %v387 = vrot.slane %v386, 2
        %v388 = vadd.s32 %v386, %v387
        %v389 = vrot.slane %v388, 1
        %v390 = vadd.s32 %v388, %v389
        %v391 = vadd.s32 %v377, %v390
        %392 = vst [vmem:[%s213 + $0x3] sm:$0x1] %v391
        %v393 = vld [vmem:[%s213 + $0xc] sm:$0x1]
        %vm394 = vmand %vm373, %vm233
        %vm395 = vmand %vm374, %vm234
        %vm396 = vmand %vm375, %vm235
        %vm397 = vmand %vm376, %vm236
        %v398 = vsel %vm394, 1, 0
        %v399 = vsel %vm395, 1, 0
        %v400 = vsel %vm396, 1, 0
        %v401 = vsel %vm397, 1, 0
        %v402 = vadd.s32 %v398, %v399
        %v403 = vadd.s32 %v400, %v401
        %v404 = vadd.s32 %v402, %v403
        %v405 = vrot.slane %v404, 4
        %v406 = vadd.s32 %v404, %v405
        %v407 = vrot.slane %v406, 2
        %v408 = vadd.s32 %v406, %v407
        %v409 = vrot.slane %v408, 1
        %v410 = vadd.s32 %v408, %v409
        %v411 = vadd.s32 %v393, %v410
        %412 = vst [vmem:[%s213 + $0xc] sm:$0x1] %v411
        %vm413 = vcmp.eq.s32.totalorder %v224, 4
        %vm414 = vcmp.eq.s32.totalorder %v225, 4
        %vm415 = vcmp.eq.s32.totalorder %v226, 4
        %vm416 = vcmp.eq.s32.totalorder %v227, 4
        %v417 = vld [vmem:[%s213 + $0x4] sm:$0x1]
        %v418 = vsel %vm413, 1, 0
        %v419 = vsel %vm414, 1, 0
        %v420 = vsel %vm415, 1, 0
        %v421 = vsel %vm416, 1, 0
        %v422 = vadd.s32 %v418, %v419
        %v423 = vadd.s32 %v420, %v421
        %v424 = vadd.s32 %v422, %v423
        %v425 = vrot.slane %v424, 4
        %v426 = vadd.s32 %v424, %v425
        %v427 = vrot.slane %v426, 2
        %v428 = vadd.s32 %v426, %v427
        %v429 = vrot.slane %v428, 1
        %v430 = vadd.s32 %v428, %v429
        %v431 = vadd.s32 %v417, %v430
        %432 = vst [vmem:[%s213 + $0x4] sm:$0x1] %v431
        %v433 = vld [vmem:[%s213 + $0xd] sm:$0x1]
        %vm434 = vmand %vm413, %vm233
        %vm435 = vmand %vm414, %vm234
        %vm436 = vmand %vm415, %vm235
        %vm437 = vmand %vm416, %vm236
        %v438 = vsel %vm434, 1, 0
        %v439 = vsel %vm435, 1, 0
        %v440 = vsel %vm436, 1, 0
        %v441 = vsel %vm437, 1, 0
        %v442 = vadd.s32 %v438, %v439
        %v443 = vadd.s32 %v440, %v441
        %v444 = vadd.s32 %v442, %v443
        %v445 = vrot.slane %v444, 4
        %v446 = vadd.s32 %v444, %v445
        %v447 = vrot.slane %v446, 2
        %v448 = vadd.s32 %v446, %v447
        %v449 = vrot.slane %v448, 1
        %v450 = vadd.s32 %v448, %v449
        %v451 = vadd.s32 %v433, %v450
        %452 = vst [vmem:[%s213 + $0xd] sm:$0x1] %v451
        %vm453 = vcmp.eq.s32.totalorder %v224, 5
        %vm454 = vcmp.eq.s32.totalorder %v225, 5
        %vm455 = vcmp.eq.s32.totalorder %v226, 5
        %vm456 = vcmp.eq.s32.totalorder %v227, 5
        %v457 = vld [vmem:[%s213 + $0x5] sm:$0x1]
        %v458 = vsel %vm453, 1, 0
        %v459 = vsel %vm454, 1, 0
        %v460 = vsel %vm455, 1, 0
        %v461 = vsel %vm456, 1, 0
        %v462 = vadd.s32 %v458, %v459
        %v463 = vadd.s32 %v460, %v461
        %v464 = vadd.s32 %v462, %v463
        %v465 = vrot.slane %v464, 4
        %v466 = vadd.s32 %v464, %v465
        %v467 = vrot.slane %v466, 2
        %v468 = vadd.s32 %v466, %v467
        %v469 = vrot.slane %v468, 1
        %v470 = vadd.s32 %v468, %v469
        %v471 = vadd.s32 %v457, %v470
        %472 = vst [vmem:[%s213 + $0x5] sm:$0x1] %v471
        %v473 = vld [vmem:[%s213 + $0xe] sm:$0x1]
        %vm474 = vmand %vm453, %vm233
        %vm475 = vmand %vm454, %vm234
        %vm476 = vmand %vm455, %vm235
        %vm477 = vmand %vm456, %vm236
        %v478 = vsel %vm474, 1, 0
        %v479 = vsel %vm475, 1, 0
        %v480 = vsel %vm476, 1, 0
        %v481 = vsel %vm477, 1, 0
        %v482 = vadd.s32 %v478, %v479
        %v483 = vadd.s32 %v480, %v481
        %v484 = vadd.s32 %v482, %v483
        %v485 = vrot.slane %v484, 4
        %v486 = vadd.s32 %v484, %v485
        %v487 = vrot.slane %v486, 2
        %v488 = vadd.s32 %v486, %v487
        %v489 = vrot.slane %v488, 1
        %v490 = vadd.s32 %v488, %v489
        %v491 = vadd.s32 %v473, %v490
        %492 = vst [vmem:[%s213 + $0xe] sm:$0x1] %v491
        %vm493 = vcmp.eq.s32.totalorder %v224, 6
        %vm494 = vcmp.eq.s32.totalorder %v225, 6
        %vm495 = vcmp.eq.s32.totalorder %v226, 6
        %vm496 = vcmp.eq.s32.totalorder %v227, 6
        %v497 = vld [vmem:[%s213 + $0x6] sm:$0x1]
        %v498 = vsel %vm493, 1, 0
        %v499 = vsel %vm494, 1, 0
        %v500 = vsel %vm495, 1, 0
        %v501 = vsel %vm496, 1, 0
        %v502 = vadd.s32 %v498, %v499
        %v503 = vadd.s32 %v500, %v501
        %v504 = vadd.s32 %v502, %v503
        %v505 = vrot.slane %v504, 4
        %v506 = vadd.s32 %v504, %v505
        %v507 = vrot.slane %v506, 2
        %v508 = vadd.s32 %v506, %v507
        %v509 = vrot.slane %v508, 1
        %v510 = vadd.s32 %v508, %v509
        %v511 = vadd.s32 %v497, %v510
        %512 = vst [vmem:[%s213 + $0x6] sm:$0x1] %v511
        %v513 = vld [vmem:[%s213 + $0xf] sm:$0x1]
        %vm514 = vmand %vm493, %vm233
        %vm515 = vmand %vm494, %vm234
        %vm516 = vmand %vm495, %vm235
        %vm517 = vmand %vm496, %vm236
        %v518 = vsel %vm514, 1, 0
        %v519 = vsel %vm515, 1, 0
        %v520 = vsel %vm516, 1, 0
        %v521 = vsel %vm517, 1, 0
        %v522 = vadd.s32 %v518, %v519
        %v523 = vadd.s32 %v520, %v521
        %v524 = vadd.s32 %v522, %v523
        %v525 = vrot.slane %v524, 4
        %v526 = vadd.s32 %v524, %v525
        %v527 = vrot.slane %v526, 2
        %v528 = vadd.s32 %v526, %v527
        %v529 = vrot.slane %v528, 1
        %v530 = vadd.s32 %v528, %v529
        %v531 = vadd.s32 %v513, %v530
        %532 = vst [vmem:[%s213 + $0xf] sm:$0x1] %v531
        %vm533 = vcmp.eq.s32.totalorder %v224, 7
        %vm534 = vcmp.eq.s32.totalorder %v225, 7
        %vm535 = vcmp.eq.s32.totalorder %v226, 7
        %vm536 = vcmp.eq.s32.totalorder %v227, 7
        %v537 = vld [vmem:[%s213 + $0x7] sm:$0x1]
        %v538 = vsel %vm533, 1, 0
        %v539 = vsel %vm534, 1, 0
        %v540 = vsel %vm535, 1, 0
        %v541 = vsel %vm536, 1, 0
        %v542 = vadd.s32 %v538, %v539
        %v543 = vadd.s32 %v540, %v541
        %v544 = vadd.s32 %v542, %v543
        %v545 = vrot.slane %v544, 4
        %v546 = vadd.s32 %v544, %v545
        %v547 = vrot.slane %v546, 2
        %v548 = vadd.s32 %v546, %v547
        %v549 = vrot.slane %v548, 1
        %v550 = vadd.s32 %v548, %v549
        %v551 = vadd.s32 %v537, %v550
        %552 = vst [vmem:[%s213 + $0x7] sm:$0x1] %v551
        %v553 = vld [vmem:[%s213 + $0x10] sm:$0x1]
        %vm554 = vmand %vm533, %vm233
        %vm555 = vmand %vm534, %vm234
        %vm556 = vmand %vm535, %vm235
        %vm557 = vmand %vm536, %vm236
        %v558 = vsel %vm554, 1, 0
        %v559 = vsel %vm555, 1, 0
        %v560 = vsel %vm556, 1, 0
        %v561 = vsel %vm557, 1, 0
        %v562 = vadd.s32 %v558, %v559
        %v563 = vadd.s32 %v560, %v561
        %v564 = vadd.s32 %v562, %v563
        %v565 = vrot.slane %v564, 4
        %v566 = vadd.s32 %v564, %v565
        %v567 = vrot.slane %v566, 2
        %v568 = vadd.s32 %v566, %v567
        %v569 = vrot.slane %v568, 1
        %v570 = vadd.s32 %v568, %v569
        %v571 = vadd.s32 %v553, %v570
        %572 = vst [vmem:[%s213 + $0x10] sm:$0x1] %v571
        %vm573 = vcmp.eq.s32.totalorder %v224, 8
        %vm574 = vcmp.eq.s32.totalorder %v225, 8
        %vm575 = vcmp.eq.s32.totalorder %v226, 8
        %vm576 = vcmp.eq.s32.totalorder %v227, 8
        %v577 = vld [vmem:[%s213 + $0x8] sm:$0x1]
        %v578 = vsel %vm573, 1, 0
        %v579 = vsel %vm574, 1, 0
        %v580 = vsel %vm575, 1, 0
        %v581 = vsel %vm576, 1, 0
        %v582 = vadd.s32 %v578, %v579
        %v583 = vadd.s32 %v580, %v581
        %v584 = vadd.s32 %v582, %v583
        %v585 = vrot.slane %v584, 4
        %v586 = vadd.s32 %v584, %v585
        %v587 = vrot.slane %v586, 2
        %v588 = vadd.s32 %v586, %v587
        %v589 = vrot.slane %v588, 1
        %v590 = vadd.s32 %v588, %v589
        %v591 = vadd.s32 %v577, %v590
        %592 = vst [vmem:[%s213 + $0x8] sm:$0x1] %v591
        %v593 = vld [vmem:[%s213 + $0x11] sm:$0x1]
        %vm594 = vmand %vm573, %vm233
        %vm595 = vmand %vm574, %vm234
        %vm596 = vmand %vm575, %vm235
        %vm597 = vmand %vm576, %vm236
        %v598 = vsel %vm594, 1, 0
        %v599 = vsel %vm595, 1, 0
        %v600 = vsel %vm596, 1, 0
        %v601 = vsel %vm597, 1, 0
        %v602 = vadd.s32 %v598, %v599
        %v603 = vadd.s32 %v600, %v601
        %v604 = vadd.s32 %v602, %v603
        %v605 = vrot.slane %v604, 4
        %v606 = vadd.s32 %v604, %v605
        %v607 = vrot.slane %v606, 2
        %v608 = vadd.s32 %v606, %v607
        %v609 = vrot.slane %v608, 1
        %v610 = vadd.s32 %v608, %v609
        %v611 = vadd.s32 %v593, %v610
        %612 = vst [vmem:[%s213 + $0x11] sm:$0x1] %v611
        %s613 = sand.u32 %s98, 1
        %s614 = scalar_lea.sflag [#allocation4], %s613
        %s615 = sand.u32 %s98, 1
        %s616 = smul.addr %s615, 24
        %s617 = scalar_lea.vmem [#allocation7], %s616
        // Predicated region
        $region41: #{tpu_custom_call.1} parent=27 // pred_check
          %p618 = pneg %p108
        $region42: #{tpu_custom_call.1} parent=27 // pred_check_branch
          %620 = sbr.rel (%p618) target = $region44
        $region43: #{tpu_custom_call.1} parent=27 // pred_region
          %s622 = ssub.s32 384, 384
          %623 = vsyncadd %s614, %s622
          %s624 = smul.addr %s26, 3
          %s625 = smul.addr %s624, 128
          %s626 = scalar_lea.hbm %s2, %s625
          %s627 = sshll.u32 %s617, 4
          %s628 = int_to_ptr.vmem [resolvable:$true] %s627
          %633 = dma.vmem_to_hbm [thread:$0]  %s628, 384, %s626, %s614, 128, 128, 8
        $region44: #{tpu_custom_call.1} parent=27 // pred_fallthru
          _
      $region28: #{tpu_custom_call.1} parent=5 // pred_fallthru
        _
      %p634 = scmp.le.s32.totalorder 2, %s17
      // Predicated region
      $region45: #{tpu_custom_call.1} parent=5 // pred_check
        %p635 = pneg %p634
      $region46: #{tpu_custom_call.1} parent=5 // pred_check_branch
        %637 = sbr.rel (%p635) target = $region48
      $region47: #{tpu_custom_call.1} parent=5 // pred_region
        %s638 = ssub.s32 %s17, 2
        // Predicated region
        $region49: #{tpu_custom_call.1} parent=47 // pred_check
          %p639 = pneg %p114
        $region50: #{tpu_custom_call.1} parent=47 // pred_check_branch
          %641 = sbr.rel (%p639) target = $region52
        $region51: #{tpu_custom_call.1} parent=47 // pred_region
          %s642 = sand.u32 %s99, 1
          %s643 = scalar_lea.sflag [#allocation4], %s642
          %s644 = sand.u32 %s99, 1
          %s645 = smul.addr %s644, 24
          %s646 = scalar_lea.vmem [#allocation7], %s645
          %647 = dma.done %s643, 384
        $region52: #{tpu_custom_call.1} parent=47 // pred_fallthru
          _
      $region48: #{tpu_custom_call.1} parent=5 // pred_fallthru
        _
    $region6: #{tpu_custom_call.1} parent=1 // loop_footer
      %s21 = sadd.s32 1, %s17
    $region7: #{tpu_custom_call.1} parent=1 // loop_footer_branch
      %16 = sbr.rel target = $region3
    $region8: #{tpu_custom_call.1} parent=1 // loop_exit
      _
    %648 = vsyncpa [#allocation3], 1
    %s649 = scalar_lea.sflag [#allocation3], 1
    %650 = vsyncpa %s649, 1
    %651 = vsyncpa [#allocation6], 1
    %s652 = scalar_lea.sflag [#allocation6], 1
    %653 = vsyncpa %s652, 1
    %654 = vsyncpa [#allocation4], 1
    %s655 = scalar_lea.sflag [#allocation4], 1
    %656 = vsyncpa %s655, 1

</llo_original>
